<compile_context>
chip_gen: v7x
topology: tpu7x:2x2x1
jax: 0.10.0
libtpu: 0.0.40
codegen_flags: <defaults>
</compile_context>

<pallas_src>
import jax
import jax.numpy as jnp
from jax.experimental import pallas as pl
from jax.experimental.pallas import tpu as pltpu

_LANE = 128
_SUBLANE = 8


def _round_up(x, m):
    return ((x + m - 1) // m) * m


def _tpu_caps():
    """(physical VMEM bytes, TensorCores sharing the 'parallel' grid axes)."""
    vmem_cap = 64 * 1024 * 1024            # conservative default (v7x per-TC)
    try:
        info = pltpu.get_tpu_info()
        cap = getattr(info, "vmem_capacity_bytes", None)
        if cap:
            vmem_cap = int(cap)
    except Exception:
        pass
    num_tc = 2                              # safe default: feed both cores on dual-TC parts
    try:
        kind = jax.devices()[0].device_kind.lower()
        # single-TensorCore generations: v5e / v6e ("lite")
        if any(s in kind for s in ("v5e", "v5 lite", "v5lite", "v6e", "v6 lite", "v6lite")):
            num_tc = 1
    except Exception:
        pass
    return vmem_cap, num_tc


# --------------------------- kernels ---------------------------------------

def _ca_single_pass_kernel(beta_ref, x_ref, o_ref):
    """Whole (bt, c, hw_pad) slab per grid step; x is read from HBM once."""
    v = x_ref[...]                                            # (bt, c, hw) f32
    vb = v.astype(jnp.bfloat16)                               # MXU operands
    energy = jnp.einsum("bcd,bkd->bck", vb, vb,
                        preferred_element_type=jnp.float32)   # (bt, c, c)
    m = jnp.max(energy, axis=-1, keepdims=True)
    e = jnp.exp(energy - m)
    attn = (e / jnp.sum(e, axis=-1, keepdims=True)).astype(jnp.bfloat16)
    out = jnp.einsum("bkc,bkd->bcd", attn, vb,                # attn^T @ v
                     preferred_element_type=jnp.float32)
    o_ref[...] = (beta_ref[0] * out + v).astype(o_ref.dtype)


def _ca_two_phase_kernel(beta_ref, x_ref, o_ref, attn_ref):
    """grid = (batch_blocks, phase, hw_tiles); attn_ref: (bt, c, c) f32 scratch."""
    phase = pl.program_id(1)
    t = pl.program_id(2)
    n_t = pl.num_programs(2)

    v = x_ref[...]                                            # (bt, c, t_hw) f32
    vb = v.astype(jnp.bfloat16)

    @pl.when((phase == 0) & (t == 0))
    def _init():
        attn_ref[...] = jnp.zeros_like(attn_ref)

    @pl.when(phase == 0)
    def _accumulate_gram():
        attn_ref[...] += jnp.einsum("bcd,bkd->bck", vb, vb,
                                    preferred_element_type=jnp.float32)

    @pl.when((phase == 0) & (t == n_t - 1))
    def _softmax():
        energy = attn_ref[...]                                # (bt, c, c)
        m = jnp.max(energy, axis=-1, keepdims=True)
        e = jnp.exp(energy - m)
        attn_ref[...] = e / jnp.sum(e, axis=-1, keepdims=True)

    @pl.when(phase == 1)
    def _apply():
        attn = attn_ref[...].astype(jnp.bfloat16)
        out = jnp.einsum("bkc,bkd->bcd", attn, vb,
                         preferred_element_type=jnp.float32)
        o_ref[...] = (beta_ref[0] * out + v).astype(o_ref.dtype)


# --------------------------- wrapper ----------------------------------------

def channel_attention(x, beta, *, vmem_budget_bytes=None, max_hw_tile=8192):
    """x: (b, c, h, w) float32; beta: (1,) float32. Returns (b, c, h, w)."""
    b, c, h, w = x.shape
    hw = h * w
    hw_pad = _round_up(hw, _LANE)

    c_sub = _round_up(c, _SUBLANE)          # sublane-padded channel rows in VMEM
    c_lane = _round_up(c, _LANE)
    attn_bytes = 4 * c_sub * c_lane * 4     # (c,c) gram + softmax temps, per batch elem

    vmem_cap, num_tc = _tpu_caps()
    if vmem_budget_bytes is None:
        tile_budget = min(vmem_cap * 3 // 8, 48 * 1024 * 1024)   # ~24 MiB v7x, ~48 MiB v5e/v6e
        single_budget = max(tile_budget, vmem_cap // 2)          # ~32 MiB v7x, ~64 MiB v5e/v6e
    else:
        tile_budget = vmem_budget_bytes
        single_budget = vmem_budget_bytes

    min_batch_grid = min(num_tc, b)          # keep every TensorCore busy, no more

    def est_single(bt_):
        # 2x double-buffered in + 2x out buffers + bf16 cast temp + f32 out temp
        slab = bt_ * c_sub * hw_pad * 4
        return 6 * slab + bt_ * attn_bytes

    def est_tiled(bt_, t_hw_):
        tile = bt_ * c_sub * t_hw_ * 4
        return 6 * tile + bt_ * attn_bytes

    def pick_bt(fits):
        for cand in range(b, 0, -1):
            if b % cand == 0 and (b // cand) >= min_batch_grid and fits(cand):
                return cand
        return 1

    x_flat = x.reshape(b, c, hw)

    # ---------------- single-pass fast path ---------------------------------
    if est_single(1) <= single_budget:
        bt = pick_bt(lambda bt_: est_single(bt_) <= single_budget)
        nb = b // bt
        est = est_single(bt)
        vmem_limit = int(min(vmem_cap * 3 // 4,
                             max(32 * 1024 * 1024, est + est // 2 + (4 << 20))))
        if hw_pad != hw:
            x_flat = jnp.pad(x_flat, ((0, 0), (0, 0), (0, hw_pad - hw)))
        out_flat = pl.pallas_call(
            _ca_single_pass_kernel,
            out_shape=jax.ShapeDtypeStruct((b, c, hw_pad), x.dtype),
            grid=(nb,),
            in_specs=[
                pl.BlockSpec(memory_space=pltpu.MemorySpace.SMEM),       # beta
                pl.BlockSpec((bt, c, hw_pad), lambda i: (i, 0, 0)),      # x slab
            ],
            out_specs=pl.BlockSpec((bt, c, hw_pad), lambda i: (i, 0, 0)),
            compiler_params=pltpu.CompilerParams(
                dimension_semantics=("parallel",),
                vmem_limit_bytes=vmem_limit,
            ),
        )(beta, x_flat)
        return out_flat[:, :, :hw].reshape(b, c, h, w)

    # ---------------- tiled two-phase fallback -------------------------------
    # lane tile: as large as the per-step budget allows at bt=1, capped by max_hw_tile
    cap = (tile_budget - attn_bytes) // (6 * c_sub * 4)
    cap = max(_LANE, (min(cap, max_hw_tile) // _LANE) * _LANE)
    if hw_pad <= cap:
        t_hw = hw_pad
    else:
        # prefer a tile that divides hw_pad exactly (no extra zero padding)
        m = hw_pad // _LANE
        best = _LANE
        for d in range(1, m + 1):
            if m % d == 0 and _LANE * d <= cap:
                best = _LANE * d
        if best >= min(512, cap):
            t_hw = best
        else:
            t_hw = cap
            hw_pad = _round_up(hw_pad, t_hw)
    n_hw = hw_pad // t_hw

    bt = pick_bt(lambda bt_: est_tiled(bt_, t_hw) <= tile_budget)
    nb = b // bt
    est = est_tiled(bt, t_hw)
    vmem_limit = int(min(vmem_cap * 3 // 4,
                         max(32 * 1024 * 1024, est + est // 2 + (4 << 20))))

    if hw_pad != hw:
        x_flat = jnp.pad(x_flat, ((0, 0), (0, 0), (0, hw_pad - hw)))

    # Phase 0 walks hw tiles forward; phase 1 walks them in REVERSE so the tile
    # resident at the end of phase 0 is reused (its DMA is skipped).  The output
    # block is parked at tile n_hw-1 during phase 0: its block index does not
    # change across the phase-0 -> phase-1 boundary, so the never-written
    # buffer is never flushed to HBM.
    def x_index(i, p, t):
        return (i, 0, t + p * (n_hw - 1 - 2 * t))    # p=0: t      p=1: n_hw-1-t

    def o_index(i, p, t):
        return (i, 0, (n_hw - 1) - p * t)            # p=0: parked  p=1: n_hw-1-t

    out_flat = pl.pallas_call(
        _ca_two_phase_kernel,
        out_shape=jax.ShapeDtypeStruct((b, c, hw_pad), x.dtype),
        grid=(nb, 2, n_hw),
        in_specs=[
            pl.BlockSpec(memory_space=pltpu.MemorySpace.SMEM),           # beta
            pl.BlockSpec((bt, c, t_hw), x_index),                        # x tile
        ],
        out_specs=pl.BlockSpec((bt, c, t_hw), o_index),
        scratch_shapes=[pltpu.VMEM((bt, c, c), jnp.float32)],
        compiler_params=pltpu.CompilerParams(
            dimension_semantics=("parallel", "arbitrary", "arbitrary"),
            vmem_limit_bytes=vmem_limit,
        ),
    )(beta, x_flat)

    return out_flat[:, :, :hw].reshape(b, c, h, w)


# --------------------------- reference & tests ------------------------------

def channel_attention_ref(x, beta):
    """Pure-JAX f32 reference mirroring the PyTorch forward exactly."""
    b, c, h, w = x.shape
    v = x.reshape(b, c, h * w)
    energy = jnp.einsum("bcd,bkd->bck", v, v)
    attn = jax.nn.softmax(energy, axis=-1)
    out = jnp.einsum("bkc,bkd->bcd", attn, v)    # attn.transpose(1,2) @ v
    return (beta[0] * out + v).reshape(b, c, h, w)


if __name__ == "__main__":
    root = jax.random.PRNGKey(0)

    # (shape, wrapper kwargs) — covers: single-pass fast path (default budgets),
    # lane padding, a larger-c single-pass case, the tiled two-phase path with
    # multi-tile gram accumulation + reverse-walk reuse and a batch boundary
    # (forced via a tiny budget), and the non-divisor re-padding fallback.
    cases = [
        ((2, 4, 16, 16), {}),                                        # single-pass
        ((2, 4, 10, 10), {}),                                        # single-pass, lane pad
        ((2, 32, 12, 20), {}),                                       # single-pass, larger c
        ((2, 8, 16, 48), {"vmem_budget_bytes": 64 * 1024}),          # two-phase, n_hw=3, b=2
        ((1, 4, 16, 40), {"vmem_budget_bytes": 80 * 1024}),          # two-phase, re-pad fallback
    ]

    for idx, (shape, kw) in enumerate(cases):
        key = jax.random.fold_in(root, idx)
        x = jax.random.normal(key, shape, dtype=jnp.float32)
        # beta=0.0 matches the module init (exact residual path); beta=0.5
        # exercises the attention path (tolerance covers bf16 MXU operands).
        for bval, atol, rtol in ((0.0, 1e-6, 1e-6), (0.5, 3e-2, 3e-2)):
            beta = jnp.full((1,), bval, dtype=jnp.float32)
            out = jax.block_until_ready(channel_attention(x, beta, **kw))
            ref = channel_attention_ref(x, beta)
            assert out.shape == shape
            max_err = float(jnp.max(jnp.abs(out - ref)))
            assert jnp.allclose(out, ref, atol=atol, rtol=rtol), (
                f"mismatch shape={shape} beta={bval} kw={kw}: max abs err {max_err}"
            )

    print("KERNEL_OK")
</pallas_src>

<mosaic_0001>
module attributes {stable_mosaic.version = 11 : i64} {
  func.func @_ca_single_pass_kernel(%arg0: i32, %arg1: memref<1xf32, #tpu.memory_space<smem>>, %arg2: memref<1x4x256xf32, #tpu.memory_space<vmem>>, %arg3: memref<1x4x256xf32, #tpu.memory_space<vmem>>) attributes {dimension_semantics = [#tpu.dimension_semantics<parallel>], iteration_bounds = array<i64: 2>, scalar_prefetch = 0 : i64, scratch_operands = 0 : i64, tpu.core_type = #tpu.core_type<tc>, window_params = [{transform_indices = @transform_0, window_bounds = array<i64: 1>}, {transform_indices = @transform_1, window_bounds = array<i64: 1, 4, 256>}, {transform_indices = @transform_2, window_bounds = array<i64: 1, 4, 256>}]} {
    %c0 = arith.constant 0 : index
    %c0_0 = arith.constant 0 : index
    %c0_1 = arith.constant 0 : index
    %0 = vector.load %arg2[%c0, %c0_0, %c0_1] : memref<1x4x256xf32, #tpu.memory_space<vmem>>, vector<1x4x256xf32>
    %1 = arith.truncf %0 : vector<1x4x256xf32> to vector<1x4x256xbf16>
    "tpu.trace_start"() <{level = 10 : i32, message = "bcd,bkd->bck"}> : () -> ()
    %cst = arith.constant dense<0.000000e+00> : vector<1x4x4xf32>
    %2 = tpu.matmul %1, %1, %cst {dimension_numbers = #tpu.dot_dimension_numbers<[2], [2], [1], [1], [0, 0, 0, 1, 1, 1], [0], [0]>} : vector<1x4x256xbf16>, vector<1x4x256xbf16>, vector<1x4x4xf32> -> vector<1x4x4xf32>
    "tpu.trace_stop"() : () -> ()
    %cst_2 = arith.constant dense<0xFF800000> : vector<1x4xf32>
    %3 = vector.multi_reduction <maximumf>, %2, %cst_2 [2] : vector<1x4x4xf32> to vector<1x4xf32>
    %4 = vector.shape_cast %3 : vector<1x4xf32> to vector<1x4x1xf32>
    %5 = vector.broadcast %4 : vector<1x4x1xf32> to vector<1x4x4xf32>
    %6 = arith.subf %2, %5 : vector<1x4x4xf32>
    %7 = math.exp %6 : vector<1x4x4xf32>
    %cst_3 = arith.constant dense<0.000000e+00> : vector<1x4xf32>
    %8 = vector.multi_reduction <add>, %7, %cst_3 [2] : vector<1x4x4xf32> to vector<1x4xf32>
    %9 = vector.shape_cast %8 : vector<1x4xf32> to vector<1x4x1xf32>
    %10 = vector.broadcast %9 : vector<1x4x1xf32> to vector<1x4x4xf32>
    %11 = arith.divf %7, %10 : vector<1x4x4xf32>
    %12 = arith.truncf %11 : vector<1x4x4xf32> to vector<1x4x4xbf16>
    "tpu.trace_start"() <{level = 10 : i32, message = "bkc,bkd->bcd"}> : () -> ()
    %cst_4 = arith.constant dense<0.000000e+00> : vector<1x4x256xf32>
    %13 = tpu.matmul %12, %1, %cst_4 {dimension_numbers = #tpu.dot_dimension_numbers<[1], [1], [2], [2], [0, 0, 0, 2, 1, 2], [0], [0]>} : vector<1x4x4xbf16>, vector<1x4x256xbf16>, vector<1x4x256xf32> -> vector<1x4x256xf32>
    "tpu.trace_stop"() : () -> ()
    %c0_5 = arith.constant 0 : index
    %14 = memref.load %arg1[%c0_5] : memref<1xf32, #tpu.memory_space<smem>>
    %15 = vector.broadcast %14 : f32 to vector<1x4x256xf32>
    %16 = arith.mulf %15, %13 : vector<1x4x256xf32>
    %17 = arith.addf %16, %0 : vector<1x4x256xf32>
    %c0_6 = arith.constant 0 : index
    %c0_7 = arith.constant 0 : index
    %c0_8 = arith.constant 0 : index
    %18 = vector.load %arg3[%c0_6, %c0_7, %c0_8] : memref<1x4x256xf32, #tpu.memory_space<vmem>>, vector<1x4x256xf32>
    tpu.vector_store %arg3[%c0_6, %c0_7, %c0_8], %17 {strides = array<i32>} : memref<1x4x256xf32, #tpu.memory_space<vmem>>, vector<1x4x256xf32>,
    return
  }
  func.func @transform_0(%arg0: i32) -> i32 {
    %c0_i32 = arith.constant 0 : i32
    %c0_i32_0 = arith.constant 0 : i32
    return %c0_i32 : i32
  }
  func.func @transform_1(%arg0: i32) -> (i32, i32, i32) {
    %c0_i32 = arith.constant 0 : i32
    %c0_i32_0 = arith.constant 0 : i32
    %c0_i32_1 = arith.constant 0 : i32
    return %arg0, %c0_i32, %c0_i32_0 : i32, i32, i32
  }
  func.func @transform_2(%arg0: i32) -> (i32, i32, i32) {
    %c0_i32 = arith.constant 0 : i32
    %c0_i32_0 = arith.constant 0 : i32
    %c0_i32_1 = arith.constant 0 : i32
    return %arg0, %c0_i32, %c0_i32_0 : i32, i32, i32
  }
}

</mosaic_0001>

<llo_original>
// kernel: tpu_custom_call.1
$region0: #{tpu_custom_call.1}
  #allocation0 [shape = 'u32[]', space=smem, size = 0x4, offset = 0x4, fixed_abs, tag = 'smem constant byte address 0x4 - core index']
  #allocation1 [shape = 'u32[144,128]{1,0:T(1,128)}', space=vmem, size = 0x12000, scoped, tag = 'internal scratch']
  #allocation2 [shape = 'f32[1]{0:T(128)S(6)}', space=smem, size = 0x200, scoped, tag = 'scoped memory for tpu_custom_call.1']
  %s0 = inlined_call_operand.<no memory space> [shape: f32[1], index: 0, kind: input, shape index: {}]
  %s1 = inlined_call_operand.hbm [shape: f32[2,4,256], index: 1, kind: input, shape index: {}]
  %s2 = inlined_call_operand.hbm [shape: f32[2,4,256], index: 2, kind: output, shape index: {}]
  %s3 = sld [smem:[#allocation0]]
  $region45: #{tpu_custom_call.1} parent=0
    _
  %s5 = ssub.s32 1, %s3
  %s6 = scalar_select 0, %s5, %s3
  %7 = sst [smem:[#allocation2]] %s0
  $region1: #{tpu_custom_call.1} parent=0
    #allocation3 [shape = 'u8[8192]{0}', space=vmem, size = 0x2000, scoped, tag = 'input window, operand 1']
    #allocation4 [shape = 's32[2]{0}', space=sflag, size = 0x8, scoped, tag = 'scoped memory for tpu_custom_call.1']
    #allocation5 [shape = 's32[2]{0}', space=sflag, size = 0x8, scoped, tag = 'scoped memory for tpu_custom_call.1']
    #allocation6 [shape = 'u8[8192]{0}', space=vmem, size = 0x2000, scoped, tag = 'output window, operand 0']
    %8 = vsyncpa [#allocation4], 0
    %s9 = scalar_lea.sflag [#allocation4], 1
    %10 = vsyncpa %s9, 0
    %11 = vsyncpa [#allocation5], 0
    %s12 = scalar_lea.sflag [#allocation5], 1
    %13 = vsyncpa %s12, 0
    loop: start=0, step=1, limit=4
    $region2: #{tpu_custom_call.1} parent=1 // loop_pre_header
      _
    $region3: #{tpu_custom_call.1} parent=1 // loop_header
      %s15 = sphi 0, %s19
      %p16 = scmp.ge.s32.totalorder %s15, 4
      %s23 = sphi 0, %s23
      %s25 = sphi 0, %s23
      %s26 = sphi 0, %s25
      %s40 = sphi 0, %s26
      %s46 = sphi 0, %s48
      %s49 = sphi 0, %s46
      %s50 = sphi 0, %s49
      %s66 = sphi 0, %s50
      %s72 = sphi 0, %s74
      %s75 = sphi 0, %s72
      %s76 = sphi 0, %s75
      %s92 = sphi 0, %s76
    $region4: #{tpu_custom_call.1} parent=1 // loop_header_branch
      %18 = sbr.rel (%p16) target = $region8
    $region5: #{tpu_custom_call.1} parent=1 // loop_body
      %s20 = ssub.s32 %s15, 1
      %s21 = ssub.s32 %s15, 2
      %s22 = sadd.s32 %s15, 1
      %s24 = sadd.s32 %s23, 1
      %p27 = scmp.eq.s32.totalorder %s15, 1
      %p28 = scmp.ne.s32.totalorder %s23, %s25
      %p29 = scmp.eq.s32.totalorder %s15, 0
      %p30 = por %p28, %p29
      %p31 = scmp.ne.s32.totalorder %s23, %s25
      %p32 = scmp.eq.s32.totalorder %s20, 1
      %p33 = por %p31, %p32
      %p34 = scmp.ne.s32.totalorder %s25, %s26
      %p35 = scmp.eq.s32.totalorder %s20, 0
      %p36 = por %p34, %p35
      %p37 = scmp.ne.s32.totalorder %s25, %s26
      %p38 = scmp.eq.s32.totalorder %s21, 1
      %p39 = por %p37, %p38
      %p41 = scmp.ne.s32.totalorder %s26, %s40
      %p42 = scmp.eq.s32.totalorder %s21, 0
      %p43 = por %p41, %p42
      %s44 = ssub.s32 %s15, %s22
      %p45 = scmp.eq.s32.totalorder %s44, 0
      %s47 = sadd.s32 %s46, 1
      %s48 = scalar_select %p45, %s46, %s47
      %p51 = pneg %p45
      %p52 = scmp.eq.s32.totalorder %s15, 1
      %p53 = por %p51, %p52
      %p54 = scmp.ne.s32.totalorder %s46, %s49
      %p55 = scmp.eq.s32.totalorder %s15, 0
      %p56 = por %p54, %p55
      %p57 = scmp.ne.s32.totalorder %s46, %s49
      %p58 = scmp.eq.s32.totalorder %s20, 1
      %p59 = por %p57, %p58
      %p60 = scmp.ne.s32.totalorder %s49, %s50
      %p61 = scmp.eq.s32.totalorder %s20, 0
      %p62 = por %p60, %p61
      %p63 = scmp.ne.s32.totalorder %s49, %s50
      %p64 = scmp.eq.s32.totalorder %s21, 1
      %p65 = por %p63, %p64
      %p67 = scmp.ne.s32.totalorder %s50, %s66
      %p68 = scmp.eq.s32.totalorder %s21, 0
      %p69 = por %p67, %p68
      %s70 = ssub.s32 %s15, %s22
      %p71 = scmp.eq.s32.totalorder %s70, 0
      %s73 = sadd.s32 %s72, 1
      %s74 = scalar_select %p71, %s72, %s73
      %p77 = pneg %p71
      %p78 = scmp.eq.s32.totalorder %s15, 1
      %p79 = por %p77, %p78
      %p80 = scmp.ne.s32.totalorder %s72, %s75
      %p81 = scmp.eq.s32.totalorder %s15, 0
      %p82 = por %p80, %p81
      %p83 = scmp.ne.s32.totalorder %s72, %s75
      %p84 = scmp.eq.s32.totalorder %s20, 1
      %p85 = por %p83, %p84
      %p86 = scmp.ne.s32.totalorder %s75, %s76
      %p87 = scmp.eq.s32.totalorder %s20, 0
      %p88 = por %p86, %p87
      %p89 = scmp.ne.s32.totalorder %s75, %s76
      %p90 = scmp.eq.s32.totalorder %s21, 1
      %p91 = por %p89, %p90
      %p93 = scmp.ne.s32.totalorder %s76, %s92
      %p94 = scmp.eq.s32.totalorder %s21, 0
      %p95 = por %p93, %p94
      %p96 = scmp.le.s32.totalorder 1, %s15
      %p97 = scmp.lt.s32.totalorder %s15, 3
      %p98 = pnand %p96, %p97
      %p99 = pneg %p98
      // Predicated region
      $region9: #{tpu_custom_call.1} parent=5 // pred_check
        _
      $region10: #{tpu_custom_call.1} parent=5 // pred_check_branch
        %101 = sbr.rel (%p98) target = $region12
      $region11: #{tpu_custom_call.1} parent=5 // pred_region
        %s102 = ssub.s32 %s15, 1
        // Predicated region
        $region13: #{tpu_custom_call.1} parent=11 // pred_check
          %p103 = pneg %p36
        $region14: #{tpu_custom_call.1} parent=11 // pred_check_branch
          %105 = sbr.rel (%p103) target = $region16
        $region15: #{tpu_custom_call.1} parent=11 // pred_region
          _
        $region16: #{tpu_custom_call.1} parent=11 // pred_fallthru
          _
      $region12: #{tpu_custom_call.1} parent=5 // pred_fallthru
        _
      %p106 = scmp.lt.s32.totalorder %s15, 2
      // Predicated region
      $region17: #{tpu_custom_call.1} parent=5 // pred_check
        %p107 = pneg %p106
      $region18: #{tpu_custom_call.1} parent=5 // pred_check_branch
        %109 = sbr.rel (%p107) target = $region20
      $region19: #{tpu_custom_call.1} parent=5 // pred_region
        // Predicated region
        $region21: #{tpu_custom_call.1} parent=19 // pred_check
          %p110 = pneg %p56
        $region22: #{tpu_custom_call.1} parent=19 // pred_check_branch
          %112 = sbr.rel (%p110) target = $region24
        $region23: #{tpu_custom_call.1} parent=19 // pred_region
          %s113 = sand.u32 %s46, 1
          %s114 = scalar_lea.sflag [#allocation4], %s113
          %s115 = sand.u32 %s46, 1
          %s116 = smul.addr %s115, 8
          %s117 = scalar_lea.vmem [#allocation3], %s116
          %s119 = ssub.s32 128, 128
          %120 = vsyncadd %s114, %s119
          %s121 = smul.addr %s15, 2
          %s122 = smul.addr %s121, 64
          %s123 = scalar_lea.hbm %s1, %s122
          %s125 = sshll.u32 %s117, 4
          %s126 = int_to_ptr.vmem [resolvable:$true] %s125
          %128 = dma.hbm_to_vmem [thread:$0]  %s123, 128, %s126, %s114
        $region24: #{tpu_custom_call.1} parent=19 // pred_fallthru
          _
      $region20: #{tpu_custom_call.1} parent=5 // pred_fallthru
        _
      %p129 = scmp.le.s32.totalorder 1, %s15
      %p130 = scmp.lt.s32.totalorder %s15, 3
      %p131 = pnand %p129, %p130
      %p132 = pneg %p131
      // Predicated region
      $region25: #{tpu_custom_call.1} parent=5 // pred_check
        _
      $region26: #{tpu_custom_call.1} parent=5 // pred_check_branch
        %134 = sbr.rel (%p131) target = $region28
      $region27: #{tpu_custom_call.1} parent=5 // pred_region
        %s135 = ssub.s32 %s15, 1
        %s136 = sand.u32 %s49, 1
        %s137 = scalar_lea.sflag [#allocation4], %s136
        %s138 = sand.u32 %s49, 1
        %s139 = smul.addr %s138, 8
        %s140 = scalar_lea.vmem [#allocation3], %s139
        // Predicated region
        $region29: #{tpu_custom_call.1} parent=27 // pred_check
          %p141 = pneg %p62
        $region30: #{tpu_custom_call.1} parent=27 // pred_check_branch
          %143 = sbr.rel (%p141) target = $region32
        $region31: #{tpu_custom_call.1} parent=27 // pred_region
          %144 = dma.done %s137, 128
        $region32: #{tpu_custom_call.1} parent=27 // pred_fallthru
          _
        %p145 = pneg %p36
        %p146 = pneg %p33
        %s147 = sand.u32 %s49, 1
        %s148 = scalar_lea.sflag [#allocation4], %s147
        %s149 = sand.u32 %s49, 1
        %s150 = smul.addr %s149, 8
        %s151 = scalar_lea.vmem [#allocation3], %s150
        %p152 = pneg %p62
        %p153 = pneg %p59
        %p154 = pneg %p88
        %p155 = pneg %p85
        %s156 = sand.u32 %s75, 1
        %s157 = scalar_lea.sflag [#allocation5], %s156
        %s158 = sand.u32 %s75, 1
        %s159 = smul.addr %s158, 8
        %s160 = scalar_lea.vmem [#allocation6], %s159
        %v162 = vld [vmem:[%s140] sm:$0xff]
        %v164 = vcombine.high %v162, %v162
        %v166 = vpack.c.bf16 %v162, %v162
        %v167 = vpack.c.bf16 %v164, %v164
        %168 = vmatprep.subr.bf16.mxu0 %v167
        %169 = vmatpush1.bf16.xpose.msra.mxu0 %v166
        %170 = vmatprep.subr.bf16.mxu0 0
        %171 = vmatpush1.bf16.xpose.msra.mxu0 0
        %172 = vmatprep.subr.bf16.mxu0 0
        %173 = vmatpush1.bf16.xpose.msra.mxu0 0
        %174 = vmatprep.subr.bf16.mxu0 0
        %175 = vmatpush1.bf16.xpose.msra.mxu0 0
        %176 = vmatprep.subr.bf16.mxu0 0
        %177 = vmatpush1.bf16.xpose.msra.mxu0 0
        %178 = vmatprep.subr.bf16.mxu0 0
        %179 = vmatpush1.bf16.xpose.msra.mxu0 0
        %180 = vmatprep.subr.bf16.mxu0 0
        %181 = vmatpush1.bf16.xpose.msra.mxu0 0
        %182 = vmatprep.subr.bf16.mxu0 0
        %183 = vmatpush1.bf16.xpose.msra.mxu0 0
        %184 = vmatprep.subr.bf16.mxu0 0
        %185 = vmatpush1.bf16.xpose.msra.mxu0 0
        %186 = vmatprep.subr.bf16.mxu0 0
        %187 = vmatpush1.bf16.xpose.msra.mxu0 0
        %188 = vmatprep.subr.bf16.mxu0 0
        %189 = vmatpush1.bf16.xpose.msra.mxu0 0
        %190 = vmatprep.subr.bf16.mxu0 0
        %191 = vmatpush1.bf16.xpose.msra.mxu0 0
        %192 = vmatprep.subr.bf16.mxu0 0
        %193 = vmatpush1.bf16.xpose.msra.mxu0 0
        %194 = vmatprep.subr.bf16.mxu0 0
        %195 = vmatpush1.bf16.xpose.msra.mxu0 0
        %196 = vmatprep.subr.bf16.mxu0 0
        %197 = vmatpush1.bf16.xpose.msra.mxu0 0
        %198 = vmatprep.subr.bf16.mxu0 0
        %199 = vmatpush1.bf16.xpose.msra.mxu0 0
        %200 = vmatprep.mubr.bf16.mxu0 %v167
        %201 = vmatmul.mubr.bf16.gmra.mrb[0].mxu0 %v166
        %v202 = vpop.f32.mrb[0].mxu0
        %v203 = vadd.f32 0.0, %v202
        %v204 = vpop.f32.mrb[0].mxu0
        %v205 = vpop.f32.mrb[0].mxu0
        %v206 = vpop.f32.mrb[0].mxu0
        %207 = vdwg.mxu0
        %vm208 = vcmask 27648
        %v209 = vsel %vm208, %v203, -inf
        %210 = vmax.xlane.f32.xlu0 %v209
        %v211 = vpop.xlane.xlu0 %210
        %v212 = vsub.f32 %v203, %v211
        %v213 = vmul.f32 %v212, 1.442695
        %v214 = vpow.pop %v213
        %v215 = vsel %vm208, %v214, 0.0
        %216 = vadd.xlane.f32.xlu0 %v215
        %v217 = vpop.xlane.xlu0 %216
        %v218 = vrcp.pop %v217
        %v219 = vmul.f32 %v214, %v218
        %v220 = vpack.c.bf16 %v219, %v219
        %221 = vxpose.xlu0.c.b16.start [1/8] %v220, 128
        %222 = vxpose.xlu0.c.b16.cont [2/8] 0, 128
        %223 = vxpose.xlu0.c.b16.cont [3/8] 0, 128
        %224 = vxpose.xlu0.c.b16.cont [4/8] 0, 128
        %225 = vxpose.xlu0.c.b16.cont [5/8] 0, 128
        %226 = vxpose.xlu0.c.b16.cont [6/8] 0, 128
        %227 = vxpose.xlu0.c.b16.cont [7/8] 0, 128
        %228 = vxpose.xlu0.c.b16.end [8/8] 0, 128
        %v229 = vpop.trf.xlu0
        %v230 = vpop.trf.xlu0
        %v231 = vpop.trf.xlu0
        %v232 = vpop.trf.xlu0
        %v233 = vpop.trf.xlu0
        %v234 = vpop.trf.xlu0
        %v235 = vpop.trf.xlu0
        %v236 = vpop.trf.xlu0
        %vm237 = vcmask 31744
        %v239 = vsel %vm237, %v229, 0
        %vm241 = vcmask 1041408
        %v243 = vsel %vm241, %v166, 0
        %v246 = vsel %vm241, %v167, 0
        %248 = vmatprep.subr.bf16.mxu0 %v246
        %249 = vmatpush1.bf16.msra.mxu0 %v243
        %250 = vmatprep.subr.bf16.mxu0 0
        %251 = vmatpush1.bf16.msra.mxu0 0
        %252 = vmatprep.subr.bf16.mxu0 0
        %253 = vmatpush1.bf16.msra.mxu0 0
        %254 = vmatprep.subr.bf16.mxu0 0
        %255 = vmatpush1.bf16.msra.mxu0 0
        %256 = vmatprep.subr.bf16.mxu0 0
        %257 = vmatpush1.bf16.msra.mxu0 0
        %258 = vmatprep.subr.bf16.mxu0 0
        %259 = vmatpush1.bf16.msra.mxu0 0
        %260 = vmatprep.subr.bf16.mxu0 0
        %261 = vmatpush1.bf16.msra.mxu0 0
        %262 = vmatprep.subr.bf16.mxu0 0
        %263 = vmatpush1.bf16.msra.mxu0 0
        %264 = vmatprep.subr.bf16.mxu0 0
        %265 = vmatpush1.bf16.msra.mxu0 0
        %266 = vmatprep.subr.bf16.mxu0 0
        %267 = vmatpush1.bf16.msra.mxu0 0
        %268 = vmatprep.subr.bf16.mxu0 0
        %269 = vmatpush1.bf16.msra.mxu0 0
        %270 = vmatprep.subr.bf16.mxu0 0
        %271 = vmatpush1.bf16.msra.mxu0 0
        %272 = vmatprep.subr.bf16.mxu0 0
        %273 = vmatpush1.bf16.msra.mxu0 0
        %274 = vmatprep.subr.bf16.mxu0 0
        %275 = vmatpush1.bf16.msra.mxu0 0
        %276 = vmatprep.subr.bf16.mxu0 0
        %277 = vmatpush1.bf16.msra.mxu0 0
        %278 = vmatprep.subr.bf16.mxu0 0
        %279 = vmatpush1.bf16.msra.mxu0 0
        %280 = vmatprep.mubr.bf16.mxu0 0
        %281 = vmatmul.mubr.bf16.gmra.mrb[0].mxu0 %v239
        %v282 = vpop.f32.mrb[0].mxu0
        %v283 = vadd.f32 0.0, %v282
        %v284 = vpop.f32.mrb[0].mxu0
        %v285 = vadd.f32 0.0, %v284
        %v286 = vpop.f32.mrb[0].mxu0
        %v287 = vpop.f32.mrb[0].mxu0
        %288 = vdwg.mxu0
        %s289 = sld [smem:[#allocation2]]
        %v290 = vstv %s289
        %v291 = vmul.f32 %v290, %v283
        %v292 = vmul.f32 %v290, %v285
        %v293 = vadd.f32 %v291, %v162
        %v294 = vadd.f32 %v292, %v164
        %v297 = vcombine.low %v293, %v294
        %299 = vst [vmem:[%s160] sm:$0xff] %v297
        %s300 = sand.u32 %s75, 1
        %s301 = scalar_lea.sflag [#allocation5], %s300
        %s302 = sand.u32 %s75, 1
        %s303 = smul.addr %s302, 8
        %s304 = scalar_lea.vmem [#allocation6], %s303
        // Predicated region
        $region33: #{tpu_custom_call.1} parent=27 // pred_check
          %p305 = pneg %p85
        $region34: #{tpu_custom_call.1} parent=27 // pred_check_branch
          %307 = sbr.rel (%p305) target = $region36
        $region35: #{tpu_custom_call.1} parent=27 // pred_region
          %s309 = ssub.s32 128, 128
          %310 = vsyncadd %s301, %s309
          %s311 = smul.addr %s20, 2
          %s312 = smul.addr %s311, 64
          %s313 = scalar_lea.hbm %s2, %s312
          %s315 = sshll.u32 %s304, 4
          %s316 = int_to_ptr.vmem [resolvable:$true] %s315
          %318 = dma.vmem_to_hbm [thread:$0]  %s316, 128, %s313, %s301
        $region36: #{tpu_custom_call.1} parent=27 // pred_fallthru
          _
      $region28: #{tpu_custom_call.1} parent=5 // pred_fallthru
        _
      %p319 = scmp.le.s32.totalorder 2, %s15
      // Predicated region
      $region37: #{tpu_custom_call.1} parent=5 // pred_check
        %p320 = pneg %p319
      $region38: #{tpu_custom_call.1} parent=5 // pred_check_branch
        %322 = sbr.rel (%p320) target = $region40
      $region39: #{tpu_custom_call.1} parent=5 // pred_region
        %s323 = ssub.s32 %s15, 2
        // Predicated region
        $region41: #{tpu_custom_call.1} parent=39 // pred_check
          %p324 = pneg %p91
        $region42: #{tpu_custom_call.1} parent=39 // pred_check_branch
          %326 = sbr.rel (%p324) target = $region44
        $region43: #{tpu_custom_call.1} parent=39 // pred_region
          %s327 = sand.u32 %s76, 1
          %s328 = scalar_lea.sflag [#allocation5], %s327
          %s329 = sand.u32 %s76, 1
          %s330 = smul.addr %s329, 8
          %s331 = scalar_lea.vmem [#allocation6], %s330
          %332 = dma.done %s328, 128
        $region44: #{tpu_custom_call.1} parent=39 // pred_fallthru
          _
      $region40: #{tpu_custom_call.1} parent=5 // pred_fallthru
        _
    $region6: #{tpu_custom_call.1} parent=1 // loop_footer
      %s19 = sadd.s32 1, %s15
    $region7: #{tpu_custom_call.1} parent=1 // loop_footer_branch
      %14 = sbr.rel target = $region3
    $region8: #{tpu_custom_call.1} parent=1 // loop_exit
      _
    %333 = vsyncpa [#allocation4], 1
    %s334 = scalar_lea.sflag [#allocation4], 1
    %335 = vsyncpa %s334, 1
    %336 = vsyncpa [#allocation5], 1
    %s337 = scalar_lea.sflag [#allocation5], 1
    %338 = vsyncpa %s337, 1

</llo_original>
